<compile_context>
chip_gen: v7x
topology: tpu7x:2x2x1
jax: 0.10.0
libtpu: 0.0.40
codegen_flags: <defaults>
</compile_context>

<pallas_src>
import jax
import jax.numpy as jnp
from jax.experimental import pallas as pl
from jax.experimental.pallas import tpu as pltpu

_PAD = 128  # lane-dense padded width for all hidden/output activations


def _mlp_kernel(x_ref, w1_ref, wr_ref, bs_ref, o_ref):
    """Fused 5-layer MLP forward for one batch tile.

    x_ref : [TB, F]          input tile
    w1_ref: [F, 128]         layer-1 weight (out padded 24 -> 128 with zeros)
    wr_ref: [4, 128, 128]    layers 2..5 weights (in/out zero-padded to 128)
    bs_ref: [5, 1, 128]      all biases (zero-padded to 128 lanes)
    o_ref : [TB, 128]        output tile (only lanes [:2] are meaningful)
    """
    # Layer 1: [TB, F] @ [F, 128]  (weights already f32; no astype needed)
    h = jnp.dot(x_ref[...], w1_ref[...], preferred_element_type=jnp.float32)
    h = jnp.maximum(h + bs_ref[0], 0.0)

    # Layers 2-4 with ReLU.  Zero-padded rows/cols keep padded lanes at 0.
    for l in range(3):
        h = jnp.dot(h, wr_ref[l], preferred_element_type=jnp.float32)
        h = jnp.maximum(h + bs_ref[l + 1], 0.0)

    # Layer 5 (no activation); padded lanes 2..127 are exactly zero.
    y = jnp.dot(h, wr_ref[3], preferred_element_type=jnp.float32) + bs_ref[4]
    o_ref[...] = y.astype(o_ref.dtype)


def _round_up(n, m):
    return ((n + m - 1) // m) * m


def _pack_params(params):
    """Pack 5 (W[in,out], b[1,out]) pairs into padded, lane-dense slabs."""
    w1, b1 = params[0]
    F, n1 = w1.shape
    w1p = jnp.zeros((F, _PAD), jnp.float32).at[:, :n1].set(w1)

    wr = jnp.zeros((4, _PAD, _PAD), jnp.float32)
    bs = jnp.zeros((5, 1, _PAD), jnp.float32)
    bs = bs.at[0, 0, :n1].set(jnp.reshape(b1, (-1,)))
    for l, (w, b) in enumerate(params[1:]):
        kin, kout = w.shape
        wr = wr.at[l, :kin, :kout].set(w)
        bs = bs.at[l + 1, 0, :kout].set(jnp.reshape(b, (-1,)))
    return w1p, wr, bs


def stock_classifier_forward(x, params, *, block_b=1024):
    """x: [B, F] float32.  params: list of (W[in,out], b[1,out]) for 5 layers."""
    B, F = x.shape
    out_dim = params[-1][0].shape[1]

    w1p, wr, bs = _pack_params(params)

    # Batch tile: multiple of 8 sublanes, capped by block_b; pad B so the
    # grid divides evenly (padded rows are discarded after the call).
    TB = min(block_b, _round_up(B, 8))
    B_pad = _round_up(B, TB)
    if B_pad != B:
        x = jnp.pad(x, ((0, B_pad - B), (0, 0)))
    grid = (pl.cdiv(B_pad, TB),)

    out_padded = pl.pallas_call(
        _mlp_kernel,
        out_shape=jax.ShapeDtypeStruct((B_pad, _PAD), jnp.float32),
        grid_spec=pltpu.PrefetchScalarGridSpec(
            num_scalar_prefetch=0,
            grid=grid,
            in_specs=[
                pl.BlockSpec((TB, F), lambda i: (i, 0)),          # x tile
                pl.BlockSpec((F, _PAD), lambda i: (0, 0)),        # w1 (resident)
                pl.BlockSpec((4, _PAD, _PAD), lambda i: (0, 0, 0)),  # w2..w5
                pl.BlockSpec((5, 1, _PAD), lambda i: (0, 0, 0)),  # biases
            ],
            out_specs=pl.BlockSpec((TB, _PAD), lambda i: (i, 0)),
        ),
        compiler_params=pltpu.CompilerParams(
            dimension_semantics=("parallel",)),
    )(x, w1p, wr, bs)

    return out_padded[:B, :out_dim]


def init_params(key, start):
    """Deterministic init matching the nn.Linear shapes of Stock_Classifier."""
    dims = [start, 24, 16, 8, 4, 2]
    params = []
    for i in range(len(dims) - 1):
        fan_in, fan_out = dims[i], dims[i + 1]
        key, kw, kb = jax.random.split(key, 3)
        bound = 1.0 / (fan_in ** 0.5)  # PyTorch default Linear init range
        w = jax.random.uniform(kw, (fan_in, fan_out), jnp.float32, -bound, bound)
        b = jax.random.uniform(kb, (1, fan_out), jnp.float32, -bound, bound)
        params.append((w, b))
    return params


def reference_forward(x, params):
    """Plain-JAX reference for correctness checking."""
    h = x
    for i, (w, b) in enumerate(params):
        h = h @ w + b
        if i < len(params) - 1:
            h = jnp.maximum(h, 0.0)
    return h


if __name__ == "__main__":
    start = 32   # number of input features
    params = init_params(jax.random.PRNGKey(0), start)

    # Small, single-tile case.
    key = jax.random.PRNGKey(0)
    key, kx = jax.random.split(key)
    x = jax.random.normal(kx, (8, start), jnp.float32)
    out = jax.block_until_ready(stock_classifier_forward(x, params))
    ref = reference_forward(x, params)
    assert out.shape == (8, 2), out.shape
    assert jnp.allclose(out, ref, atol=1e-5, rtol=1e-5), "mismatch (single tile)"

    # Multi-tile case exercising batch tiling + ragged-batch padding path.
    key, kx2 = jax.random.split(key)
    x2 = jax.random.normal(kx2, (40, start), jnp.float32)
    out2 = jax.block_until_ready(
        stock_classifier_forward(x2, params, block_b=16))
    ref2 = reference_forward(x2, params)
    assert out2.shape == (40, 2), out2.shape
    assert jnp.allclose(out2, ref2, atol=1e-5, rtol=1e-5), "mismatch (tiled)"

    print("KERNEL_OK")
</pallas_src>

<mosaic_0001>
module attributes {stable_mosaic.version = 11 : i64} {
  func.func @_mlp_kernel(%arg0: i32, %arg1: memref<8x32xf32, #tpu.memory_space<vmem>>, %arg2: memref<32x128xf32, #tpu.memory_space<vmem>>, %arg3: memref<4x128x128xf32, #tpu.memory_space<vmem>>, %arg4: memref<5x1x128xf32, #tpu.memory_space<vmem>>, %arg5: memref<8x128xf32, #tpu.memory_space<vmem>>) attributes {dimension_semantics = [#tpu.dimension_semantics<parallel>], iteration_bounds = array<i64: 1>, scalar_prefetch = 0 : i64, scratch_operands = 0 : i64, tpu.core_type = #tpu.core_type<tc>, window_params = [{transform_indices = @transform_0, window_bounds = array<i64: 8, 32>}, {pipeline_mode = #tpu.pipeline_mode<synchronous>, transform_indices = @transform_1, window_bounds = array<i64: 32, 128>}, {pipeline_mode = #tpu.pipeline_mode<synchronous>, transform_indices = @transform_2, window_bounds = array<i64: 4, 128, 128>}, {pipeline_mode = #tpu.pipeline_mode<synchronous>, transform_indices = @transform_3, window_bounds = array<i64: 5, 1, 128>}, {transform_indices = @transform_4, window_bounds = array<i64: 8, 128>}]} {
    %c0 = arith.constant 0 : index
    %c0_0 = arith.constant 0 : index
    %0 = vector.load %arg1[%c0, %c0_0] : memref<8x32xf32, #tpu.memory_space<vmem>>, vector<8x32xf32>
    %c0_1 = arith.constant 0 : index
    %c0_2 = arith.constant 0 : index
    %1 = vector.load %arg2[%c0_1, %c0_2] : memref<32x128xf32, #tpu.memory_space<vmem>>, vector<32x128xf32>
    %cst = arith.constant dense<0.000000e+00> : vector<8x128xf32>
    %2 = tpu.matmul %0, %1, %cst {dimension_numbers = #tpu.dot_dimension_numbers<[1], [0], [0], [1], [0, 0, 1, 1], [], []>} : vector<8x32xf32>, vector<32x128xf32>, vector<8x128xf32> -> vector<8x128xf32>
    %c0_3 = arith.constant 0 : index
    %c0_4 = arith.constant 0 : index
    %c0_5 = arith.constant 0 : index
    %3 = vector.load %arg4[%c0_3, %c0_4, %c0_5] : memref<5x1x128xf32, #tpu.memory_space<vmem>>, vector<1x1x128xf32>
    %4 = vector.shape_cast %3 : vector<1x1x128xf32> to vector<1x128xf32>
    %5 = vector.broadcast %4 : vector<1x128xf32> to vector<8x128xf32>
    %6 = arith.addf %2, %5 : vector<8x128xf32>
    %cst_6 = arith.constant 0.000000e+00 : f32
    %7 = vector.broadcast %cst_6 : f32 to vector<8x128xf32>
    %8 = arith.maximumf %6, %7 : vector<8x128xf32>
    %c0_7 = arith.constant 0 : index
    %c0_8 = arith.constant 0 : index
    %c0_9 = arith.constant 0 : index
    %9 = vector.load %arg3[%c0_7, %c0_8, %c0_9] : memref<4x128x128xf32, #tpu.memory_space<vmem>>, vector<1x128x128xf32>
    %10 = vector.shape_cast %9 : vector<1x128x128xf32> to vector<128x128xf32>
    %cst_10 = arith.constant dense<0.000000e+00> : vector<8x128xf32>
    %11 = tpu.matmul %8, %10, %cst_10 {dimension_numbers = #tpu.dot_dimension_numbers<[1], [0], [0], [1], [0, 0, 1, 1], [], []>} : vector<8x128xf32>, vector<128x128xf32>, vector<8x128xf32> -> vector<8x128xf32>
    %c1 = arith.constant 1 : index
    %c0_11 = arith.constant 0 : index
    %c0_12 = arith.constant 0 : index
    %12 = vector.load %arg4[%c1, %c0_11, %c0_12] : memref<5x1x128xf32, #tpu.memory_space<vmem>>, vector<1x1x128xf32>
    %13 = vector.shape_cast %12 : vector<1x1x128xf32> to vector<1x128xf32>
    %14 = vector.broadcast %13 : vector<1x128xf32> to vector<8x128xf32>
    %15 = arith.addf %11, %14 : vector<8x128xf32>
    %cst_13 = arith.constant 0.000000e+00 : f32
    %16 = vector.broadcast %cst_13 : f32 to vector<8x128xf32>
    %17 = arith.maximumf %15, %16 : vector<8x128xf32>
    %c1_14 = arith.constant 1 : index
    %c0_15 = arith.constant 0 : index
    %c0_16 = arith.constant 0 : index
    %18 = vector.load %arg3[%c1_14, %c0_15, %c0_16] : memref<4x128x128xf32, #tpu.memory_space<vmem>>, vector<1x128x128xf32>
    %19 = vector.shape_cast %18 : vector<1x128x128xf32> to vector<128x128xf32>
    %cst_17 = arith.constant dense<0.000000e+00> : vector<8x128xf32>
    %20 = tpu.matmul %17, %19, %cst_17 {dimension_numbers = #tpu.dot_dimension_numbers<[1], [0], [0], [1], [0, 0, 1, 1], [], []>} : vector<8x128xf32>, vector<128x128xf32>, vector<8x128xf32> -> vector<8x128xf32>
    %c2 = arith.constant 2 : index
    %c0_18 = arith.constant 0 : index
    %c0_19 = arith.constant 0 : index
    %21 = vector.load %arg4[%c2, %c0_18, %c0_19] : memref<5x1x128xf32, #tpu.memory_space<vmem>>, vector<1x1x128xf32>
    %22 = vector.shape_cast %21 : vector<1x1x128xf32> to vector<1x128xf32>
    %23 = vector.broadcast %22 : vector<1x128xf32> to vector<8x128xf32>
    %24 = arith.addf %20, %23 : vector<8x128xf32>
    %cst_20 = arith.constant 0.000000e+00 : f32
    %25 = vector.broadcast %cst_20 : f32 to vector<8x128xf32>
    %26 = arith.maximumf %24, %25 : vector<8x128xf32>
    %c2_21 = arith.constant 2 : index
    %c0_22 = arith.constant 0 : index
    %c0_23 = arith.constant 0 : index
    %27 = vector.load %arg3[%c2_21, %c0_22, %c0_23] : memref<4x128x128xf32, #tpu.memory_space<vmem>>, vector<1x128x128xf32>
    %28 = vector.shape_cast %27 : vector<1x128x128xf32> to vector<128x128xf32>
    %cst_24 = arith.constant dense<0.000000e+00> : vector<8x128xf32>
    %29 = tpu.matmul %26, %28, %cst_24 {dimension_numbers = #tpu.dot_dimension_numbers<[1], [0], [0], [1], [0, 0, 1, 1], [], []>} : vector<8x128xf32>, vector<128x128xf32>, vector<8x128xf32> -> vector<8x128xf32>
    %c3 = arith.constant 3 : index
    %c0_25 = arith.constant 0 : index
    %c0_26 = arith.constant 0 : index
    %30 = vector.load %arg4[%c3, %c0_25, %c0_26] : memref<5x1x128xf32, #tpu.memory_space<vmem>>, vector<1x1x128xf32>
    %31 = vector.shape_cast %30 : vector<1x1x128xf32> to vector<1x128xf32>
    %32 = vector.broadcast %31 : vector<1x128xf32> to vector<8x128xf32>
    %33 = arith.addf %29, %32 : vector<8x128xf32>
    %cst_27 = arith.constant 0.000000e+00 : f32
    %34 = vector.broadcast %cst_27 : f32 to vector<8x128xf32>
    %35 = arith.maximumf %33, %34 : vector<8x128xf32>
    %c3_28 = arith.constant 3 : index
    %c0_29 = arith.constant 0 : index
    %c0_30 = arith.constant 0 : index
    %36 = vector.load %arg3[%c3_28, %c0_29, %c0_30] : memref<4x128x128xf32, #tpu.memory_space<vmem>>, vector<1x128x128xf32>
    %37 = vector.shape_cast %36 : vector<1x128x128xf32> to vector<128x128xf32>
    %cst_31 = arith.constant dense<0.000000e+00> : vector<8x128xf32>
    %38 = tpu.matmul %35, %37, %cst_31 {dimension_numbers = #tpu.dot_dimension_numbers<[1], [0], [0], [1], [0, 0, 1, 1], [], []>} : vector<8x128xf32>, vector<128x128xf32>, vector<8x128xf32> -> vector<8x128xf32>
    %c4 = arith.constant 4 : index
    %c0_32 = arith.constant 0 : index
    %c0_33 = arith.constant 0 : index
    %39 = vector.load %arg4[%c4, %c0_32, %c0_33] : memref<5x1x128xf32, #tpu.memory_space<vmem>>, vector<1x1x128xf32>
    %40 = vector.shape_cast %39 : vector<1x1x128xf32> to vector<1x128xf32>
    %41 = vector.broadcast %40 : vector<1x128xf32> to vector<8x128xf32>
    %42 = arith.addf %38, %41 : vector<8x128xf32>
    %c0_34 = arith.constant 0 : index
    %c0_35 = arith.constant 0 : index
    %43 = vector.load %arg5[%c0_34, %c0_35] : memref<8x128xf32, #tpu.memory_space<vmem>>, vector<8x128xf32>
    tpu.vector_store %arg5[%c0_34, %c0_35], %42 {strides = array<i32>} : memref<8x128xf32, #tpu.memory_space<vmem>>, vector<8x128xf32>,
    return
  }
  func.func @transform_0(%arg0: i32) -> (i32, i32) {
    %c0_i32 = arith.constant 0 : i32
    %c0_i32_0 = arith.constant 0 : i32
    return %arg0, %c0_i32 : i32, i32
  }
  func.func @transform_1(%arg0: i32) -> (i32, i32) {
    %c0_i32 = arith.constant 0 : i32
    %c0_i32_0 = arith.constant 0 : i32
    %c0_i32_1 = arith.constant 0 : i32
    return %c0_i32, %c0_i32_0 : i32, i32
  }
  func.func @transform_2(%arg0: i32) -> (i32, i32, i32) {
    %c0_i32 = arith.constant 0 : i32
    %c0_i32_0 = arith.constant 0 : i32
    %c0_i32_1 = arith.constant 0 : i32
    %c0_i32_2 = arith.constant 0 : i32
    return %c0_i32, %c0_i32_0, %c0_i32_1 : i32, i32, i32
  }
  func.func @transform_3(%arg0: i32) -> (i32, i32, i32) {
    %c0_i32 = arith.constant 0 : i32
    %c0_i32_0 = arith.constant 0 : i32
    %c0_i32_1 = arith.constant 0 : i32
    %c0_i32_2 = arith.constant 0 : i32
    return %c0_i32, %c0_i32_0, %c0_i32_1 : i32, i32, i32
  }
  func.func @transform_4(%arg0: i32) -> (i32, i32) {
    %c0_i32 = arith.constant 0 : i32
    %c0_i32_0 = arith.constant 0 : i32
    return %arg0, %c0_i32 : i32, i32
  }
}

</mosaic_0001>

<llo_original>
// kernel: tpu_custom_call.1
$region0: #{tpu_custom_call.1}
  #allocation0 [shape = 'u32[]', space=smem, size = 0x4, offset = 0x4, fixed_abs, tag = 'smem constant byte address 0x4 - core index']
  #allocation1 [shape = 'u32[144,128]{1,0:T(1,128)}', space=vmem, size = 0x12000, scoped, tag = 'internal scratch']
  %s0 = inlined_call_operand.hbm [shape: f32[8,32], index: 0, kind: input, shape index: {}]
  %s1 = inlined_call_operand.hbm [shape: f32[32,128], index: 1, kind: input, shape index: {}]
  %s2 = inlined_call_operand.hbm [shape: f32[4,128,128], index: 2, kind: input, shape index: {}]
  %s3 = inlined_call_operand.vmem [shape: f32[5,1,128], index: 3, kind: input, shape index: {}]
  %s4 = inlined_call_operand.hbm [shape: f32[8,128], index: 4, kind: output, shape index: {}]
  %s5 = sld [smem:[#allocation0]]
  $region38: #{tpu_custom_call.1} parent=0
    _
  %s7 = ssub.s32 1, %s5
  %s8 = scalar_select 0, %s7, %s5
  $region1: #{tpu_custom_call.1} parent=0
    #allocation2 [shape = 'u8[4096]{0}', space=vmem, size = 0x1000, scoped, tag = 'input window, operand 0, single buffered']
    #allocation3 [shape = 's32[1]{0}', space=sflag, size = 0x4, scoped, tag = 'scoped memory for tpu_custom_call.1']
    #allocation4 [shape = 's32[1]{0}', space=sflag, size = 0x4, scoped, tag = 'scoped memory for tpu_custom_call.1']
    #allocation5 [shape = 'u8[16384]{0}', space=vmem, size = 0x4000, scoped, tag = 'input window, operand 1, single buffered']
    #allocation6 [shape = 's32[1]{0}', space=sflag, size = 0x4, scoped, tag = 'scoped memory for tpu_custom_call.1']
    #allocation7 [shape = 'u8[262144]{0}', space=vmem, size = 0x40000, scoped, tag = 'input window, operand 2, single buffered']
    #allocation8 [shape = 'u8[4096]{0}', space=vmem, size = 0x1000, scoped, tag = 'output window, operand 0, single buffered']
    %9 = vsyncpa [#allocation3], 0
    %10 = vsyncpa [#allocation6], 0
    %11 = vsyncpa [#allocation4], 0
    // Predicated region
    $region2: #{tpu_custom_call.1} parent=1 // pred_check
      _
    $region3: #{tpu_custom_call.1} parent=1 // pred_check_branch
      %13 = sbr.rel (0) target = $region5
    $region4: #{tpu_custom_call.1} parent=1 // pred_region
      %s15 = ssub.s32 128, 128
      %16 = vsyncadd [#allocation3], %s15
      %s18 = sshll.u32 [#allocation2], 4
      %s19 = int_to_ptr.vmem [resolvable:$true] %s18
      %21 = dma.hbm_to_vmem [thread:$0]  %s0, 128, %s19, [#allocation3]
    $region5: #{tpu_custom_call.1} parent=1 // pred_fallthru
      _
    // Predicated region
    $region6: #{tpu_custom_call.1} parent=1 // pred_check
      _
    $region7: #{tpu_custom_call.1} parent=1 // pred_check_branch
      %23 = sbr.rel (0) target = $region9
    $region8: #{tpu_custom_call.1} parent=1 // pred_region
      %s25 = ssub.s32 512, 512
      %26 = vsyncadd [#allocation6], %s25
      %s27 = sshll.u32 [#allocation5], 4
      %s28 = int_to_ptr.vmem [resolvable:$true] %s27
      %33 = dma.hbm_to_vmem [thread:$0]  %s1, 512, %s28, [#allocation6], 128, 128, 8
    $region9: #{tpu_custom_call.1} parent=1 // pred_fallthru
      _
    // Predicated region
    $region10: #{tpu_custom_call.1} parent=1 // pred_check
      _
    $region11: #{tpu_custom_call.1} parent=1 // pred_check_branch
      %35 = sbr.rel (0) target = $region13
    $region12: #{tpu_custom_call.1} parent=1 // pred_region
      %s37 = ssub.s32 8192, 8192
      %38 = vsyncadd [#allocation6], %s37
      %s39 = sshll.u32 [#allocation7], 4
      %s40 = int_to_ptr.vmem [resolvable:$true] %s39
      %45 = dma.hbm_to_vmem [thread:$0]  %s2, 8192, %s40, [#allocation6], 128, 128, 8
    $region13: #{tpu_custom_call.1} parent=1 // pred_fallthru
      _
    // Predicated region
    $region14: #{tpu_custom_call.1} parent=1 // pred_check
      _
    $region15: #{tpu_custom_call.1} parent=1 // pred_check_branch
      %47 = sbr.rel (0) target = $region17
    $region16: #{tpu_custom_call.1} parent=1 // pred_region
      _
    $region17: #{tpu_custom_call.1} parent=1 // pred_fallthru
      _
    // Predicated region
    $region18: #{tpu_custom_call.1} parent=1 // pred_check
      _
    $region19: #{tpu_custom_call.1} parent=1 // pred_check_branch
      %49 = sbr.rel (0) target = $region21
    $region20: #{tpu_custom_call.1} parent=1 // pred_region
      %50 = dma.done [#allocation3], 128
    $region21: #{tpu_custom_call.1} parent=1 // pred_fallthru
      _
    // Predicated region
    $region22: #{tpu_custom_call.1} parent=1 // pred_check
      _
    $region23: #{tpu_custom_call.1} parent=1 // pred_check_branch
      %52 = sbr.rel (0) target = $region25
    $region24: #{tpu_custom_call.1} parent=1 // pred_region
      %53 = dma.done [#allocation6], 512
    $region25: #{tpu_custom_call.1} parent=1 // pred_fallthru
      _
    // Predicated region
    $region26: #{tpu_custom_call.1} parent=1 // pred_check
      _
    $region27: #{tpu_custom_call.1} parent=1 // pred_check_branch
      %55 = sbr.rel (0) target = $region29
    $region28: #{tpu_custom_call.1} parent=1 // pred_region
      %56 = dma.done [#allocation6], 8192
    $region29: #{tpu_custom_call.1} parent=1 // pred_fallthru
      _
    %v57 = vld [vmem:[#allocation2] sm:$0xff]
    %v58 = vld [vmem:[#allocation5] sm:$0xff]
    %v59 = vld [vmem:[#allocation5 + $0x8] sm:$0xff]
    %v60 = vld [vmem:[#allocation5 + $0x10] sm:$0xff]
    %v61 = vld [vmem:[#allocation5 + $0x18] sm:$0xff]
    %v62 = vld [vmem:[%s3] sm:$0x1]
    %v64 = vlaneseq
    %v65 = vshrl.u32 %v64, 7
    %v66 = vsub.s32 0, %v65
    %v67 = vrot.slane %v62, %v66
    %vm69 = vcmask 261120
    %v71 = vsel %vm69, %v57, 0
    %73 = vmatprep.subr.mxu0 0.0
    %74 = vmatpush1.msra.mxu0 %v58
    %75 = vmatprep.subr.mxu0 0.0
    %76 = vmatpush1.msra.mxu0 %v59
    %77 = vmatprep.subr.mxu0 0.0
    %78 = vmatpush1.msra.mxu0 %v60
    %79 = vmatprep.subr.mxu0 0.0
    %80 = vmatpush1.msra.mxu0 %v61
    %81 = vmatprep.subr.mxu0 0.0
    %82 = vmatpush1.msra.mxu0 0.0
    %83 = vmatprep.subr.mxu0 0.0
    %84 = vmatpush1.msra.mxu0 0.0
    %85 = vmatprep.subr.mxu0 0.0
    %86 = vmatpush1.msra.mxu0 0.0
    %87 = vmatprep.subr.mxu0 0.0
    %88 = vmatpush1.msra.mxu0 0.0
    %89 = vmatprep.subr.mxu0 0.0
    %90 = vmatpush1.msra.mxu0 0.0
    %91 = vmatprep.subr.mxu0 0.0
    %92 = vmatpush1.msra.mxu0 0.0
    %93 = vmatprep.subr.mxu0 0.0
    %94 = vmatpush1.msra.mxu0 0.0
    %95 = vmatprep.subr.mxu0 0.0
    %96 = vmatpush1.msra.mxu0 0.0
    %97 = vmatprep.subr.mxu0 0.0
    %98 = vmatpush1.msra.mxu0 0.0
    %99 = vmatprep.subr.mxu0 0.0
    %100 = vmatpush1.msra.mxu0 0.0
    %101 = vmatprep.subr.mxu0 0.0
    %102 = vmatpush1.msra.mxu0 0.0
    %103 = vmatprep.subr.mxu0 0.0
    %104 = vmatpush1.msra.mxu0 0.0
    %105 = vmatprep.subr.mxu0 0.0
    %106 = vmatpush1.msra.mxu0 0.0
    %107 = vmatprep.subr.mxu0 0.0
    %108 = vmatpush1.msra.mxu0 0.0
    %109 = vmatprep.subr.mxu0 0.0
    %110 = vmatpush1.msra.mxu0 0.0
    %111 = vmatprep.subr.mxu0 0.0
    %112 = vmatpush1.msra.mxu0 0.0
    %113 = vmatprep.subr.mxu0 0.0
    %114 = vmatpush1.msra.mxu0 0.0
    %115 = vmatprep.subr.mxu0 0.0
    %116 = vmatpush1.msra.mxu0 0.0
    %117 = vmatprep.subr.mxu0 0.0
    %118 = vmatpush1.msra.mxu0 0.0
    %119 = vmatprep.subr.mxu0 0.0
    %120 = vmatpush1.msra.mxu0 0.0
    %121 = vmatprep.subr.mxu0 0.0
    %122 = vmatpush1.msra.mxu0 0.0
    %123 = vmatprep.subr.mxu0 0.0
    %124 = vmatpush1.msra.mxu0 0.0
    %125 = vmatprep.subr.mxu0 0.0
    %126 = vmatpush1.msra.mxu0 0.0
    %127 = vmatprep.subr.mxu0 0.0
    %128 = vmatpush1.msra.mxu0 0.0
    %129 = vmatprep.subr.mxu0 0.0
    %130 = vmatpush1.msra.mxu0 0.0
    %131 = vmatprep.subr.mxu0 0.0
    %132 = vmatpush1.msra.mxu0 0.0
    %133 = vmatprep.subr.mxu0 0.0
    %134 = vmatpush1.msra.mxu0 0.0
    %135 = vmatprep.subr.mxu0 0.0
    %136 = vmatpush1.msra.mxu0 0.0
    %137 = vmatprep.mubr.f32.mxu0 0.0
    %138 = vmatmul.mubr.f32.gmra.mrb[0].mxu0 %v71
    %v139 = vpop.f32.mrb[0].mxu0
    %v140 = vadd.f32 %v67, %v139
    %v141 = vpop.f32.mrb[0].mxu0
    %142 = vdwg.mxu0
    %v143 = vmax.f32 %v140, 0.0
    %v144 = vld [vmem:[#allocation7] sm:$0xff]
    %v145 = vld [vmem:[#allocation7 + $0x8] sm:$0xff]
    %v146 = vld [vmem:[#allocation7 + $0x10] sm:$0xff]
    %v147 = vld [vmem:[#allocation7 + $0x18] sm:$0xff]
    %v148 = vld [vmem:[#allocation7 + $0x20] sm:$0xff]
    %v149 = vld [vmem:[#allocation7 + $0x28] sm:$0xff]
    %v150 = vld [vmem:[#allocation7 + $0x30] sm:$0xff]
    %v151 = vld [vmem:[#allocation7 + $0x38] sm:$0xff]
    %v152 = vld [vmem:[#allocation7 + $0x40] sm:$0xff]
    %v153 = vld [vmem:[#allocation7 + $0x48] sm:$0xff]
    %v154 = vld [vmem:[#allocation7 + $0x50] sm:$0xff]
    %v155 = vld [vmem:[#allocation7 + $0x58] sm:$0xff]
    %v156 = vld [vmem:[#allocation7 + $0x60] sm:$0xff]
    %v157 = vld [vmem:[#allocation7 + $0x68] sm:$0xff]
    %v158 = vld [vmem:[#allocation7 + $0x70] sm:$0xff]
    %v159 = vld [vmem:[#allocation7 + $0x78] sm:$0xff]
    %s160 = scalar_lea.vmem %s3, 1
    %v161 = vld [vmem:[%s160] sm:$0x1]
    %v163 = vlaneseq
    %v164 = vshrl.u32 %v163, 7
    %v165 = vsub.s32 0, %v164
    %v166 = vrot.slane %v161, %v165
    %168 = vmatprep.subr.mxu0 0.0
    %169 = vmatpush1.msra.mxu0 %v144
    %170 = vmatprep.subr.mxu0 0.0
    %171 = vmatpush1.msra.mxu0 %v145
    %172 = vmatprep.subr.mxu0 0.0
    %173 = vmatpush1.msra.mxu0 %v146
    %174 = vmatprep.subr.mxu0 0.0
    %175 = vmatpush1.msra.mxu0 %v147
    %176 = vmatprep.subr.mxu0 0.0
    %177 = vmatpush1.msra.mxu0 %v148
    %178 = vmatprep.subr.mxu0 0.0
    %179 = vmatpush1.msra.mxu0 %v149
    %180 = vmatprep.subr.mxu0 0.0
    %181 = vmatpush1.msra.mxu0 %v150
    %182 = vmatprep.subr.mxu0 0.0
    %183 = vmatpush1.msra.mxu0 %v151
    %184 = vmatprep.subr.mxu0 0.0
    %185 = vmatpush1.msra.mxu0 %v152
    %186 = vmatprep.subr.mxu0 0.0
    %187 = vmatpush1.msra.mxu0 %v153
    %188 = vmatprep.subr.mxu0 0.0
    %189 = vmatpush1.msra.mxu0 %v154
    %190 = vmatprep.subr.mxu0 0.0
    %191 = vmatpush1.msra.mxu0 %v155
    %192 = vmatprep.subr.mxu0 0.0
    %193 = vmatpush1.msra.mxu0 %v156
    %194 = vmatprep.subr.mxu0 0.0
    %195 = vmatpush1.msra.mxu0 %v157
    %196 = vmatprep.subr.mxu0 0.0
    %197 = vmatpush1.msra.mxu0 %v158
    %198 = vmatprep.subr.mxu0 0.0
    %199 = vmatpush1.msra.mxu0 %v159
    %200 = vmatprep.subr.mxu0 0.0
    %201 = vmatpush1.msra.mxu0 0.0
    %202 = vmatprep.subr.mxu0 0.0
    %203 = vmatpush1.msra.mxu0 0.0
    %204 = vmatprep.subr.mxu0 0.0
    %205 = vmatpush1.msra.mxu0 0.0
    %206 = vmatprep.subr.mxu0 0.0
    %207 = vmatpush1.msra.mxu0 0.0
    %208 = vmatprep.subr.mxu0 0.0
    %209 = vmatpush1.msra.mxu0 0.0
    %210 = vmatprep.subr.mxu0 0.0
    %211 = vmatpush1.msra.mxu0 0.0
    %212 = vmatprep.subr.mxu0 0.0
    %213 = vmatpush1.msra.mxu0 0.0
    %214 = vmatprep.subr.mxu0 0.0
    %215 = vmatpush1.msra.mxu0 0.0
    %216 = vmatprep.subr.mxu0 0.0
    %217 = vmatpush1.msra.mxu0 0.0
    %218 = vmatprep.subr.mxu0 0.0
    %219 = vmatpush1.msra.mxu0 0.0
    %220 = vmatprep.subr.mxu0 0.0
    %221 = vmatpush1.msra.mxu0 0.0
    %222 = vmatprep.subr.mxu0 0.0
    %223 = vmatpush1.msra.mxu0 0.0
    %224 = vmatprep.subr.mxu0 0.0
    %225 = vmatpush1.msra.mxu0 0.0
    %226 = vmatprep.subr.mxu0 0.0
    %227 = vmatpush1.msra.mxu0 0.0
    %228 = vmatprep.subr.mxu0 0.0
    %229 = vmatpush1.msra.mxu0 0.0
    %230 = vmatprep.subr.mxu0 0.0
    %231 = vmatpush1.msra.mxu0 0.0
    %232 = vmatprep.mubr.f32.mxu0 0.0
    %233 = vmatmul.mubr.f32.gmra.mrb[0].mxu0 %v143
    %v234 = vpop.f32.mrb[0].mxu0
    %v235 = vadd.f32 %v166, %v234
    %v236 = vpop.f32.mrb[0].mxu0
    %237 = vdwg.mxu0
    %v238 = vmax.f32 %v235, 0.0
    %s239 = scalar_lea.vmem [#allocation7], 128
    %v240 = vld [vmem:[%s239] sm:$0xff]
    %v241 = vld [vmem:[%s239 + $0x8] sm:$0xff]
    %v242 = vld [vmem:[%s239 + $0x10] sm:$0xff]
    %v243 = vld [vmem:[%s239 + $0x18] sm:$0xff]
    %v244 = vld [vmem:[%s239 + $0x20] sm:$0xff]
    %v245 = vld [vmem:[%s239 + $0x28] sm:$0xff]
    %v246 = vld [vmem:[%s239 + $0x30] sm:$0xff]
    %v247 = vld [vmem:[%s239 + $0x38] sm:$0xff]
    %v248 = vld [vmem:[%s239 + $0x40] sm:$0xff]
    %v249 = vld [vmem:[%s239 + $0x48] sm:$0xff]
    %v250 = vld [vmem:[%s239 + $0x50] sm:$0xff]
    %v251 = vld [vmem:[%s239 + $0x58] sm:$0xff]
    %v252 = vld [vmem:[%s239 + $0x60] sm:$0xff]
    %v253 = vld [vmem:[%s239 + $0x68] sm:$0xff]
    %v254 = vld [vmem:[%s239 + $0x70] sm:$0xff]
    %v255 = vld [vmem:[%s239 + $0x78] sm:$0xff]
    %s256 = scalar_lea.vmem %s3, 2
    %v257 = vld [vmem:[%s256] sm:$0x1]
    %v259 = vlaneseq
    %v260 = vshrl.u32 %v259, 7
    %v261 = vsub.s32 0, %v260
    %v262 = vrot.slane %v257, %v261
    %264 = vmatprep.subr.mxu0 0.0
    %265 = vmatpush1.msra.mxu0 %v240
    %266 = vmatprep.subr.mxu0 0.0
    %267 = vmatpush1.msra.mxu0 %v241
    %268 = vmatprep.subr.mxu0 0.0
    %269 = vmatpush1.msra.mxu0 %v242
    %270 = vmatprep.subr.mxu0 0.0
    %271 = vmatpush1.msra.mxu0 %v243
    %272 = vmatprep.subr.mxu0 0.0
    %273 = vmatpush1.msra.mxu0 %v244
    %274 = vmatprep.subr.mxu0 0.0
    %275 = vmatpush1.msra.mxu0 %v245
    %276 = vmatprep.subr.mxu0 0.0
    %277 = vmatpush1.msra.mxu0 %v246
    %278 = vmatprep.subr.mxu0 0.0
    %279 = vmatpush1.msra.mxu0 %v247
    %280 = vmatprep.subr.mxu0 0.0
    %281 = vmatpush1.msra.mxu0 %v248
    %282 = vmatprep.subr.mxu0 0.0
    %283 = vmatpush1.msra.mxu0 %v249
    %284 = vmatprep.subr.mxu0 0.0
    %285 = vmatpush1.msra.mxu0 %v250
    %286 = vmatprep.subr.mxu0 0.0
    %287 = vmatpush1.msra.mxu0 %v251
    %288 = vmatprep.subr.mxu0 0.0
    %289 = vmatpush1.msra.mxu0 %v252
    %290 = vmatprep.subr.mxu0 0.0
    %291 = vmatpush1.msra.mxu0 %v253
    %292 = vmatprep.subr.mxu0 0.0
    %293 = vmatpush1.msra.mxu0 %v254
    %294 = vmatprep.subr.mxu0 0.0
    %295 = vmatpush1.msra.mxu0 %v255
    %296 = vmatprep.subr.mxu0 0.0
    %297 = vmatpush1.msra.mxu0 0.0
    %298 = vmatprep.subr.mxu0 0.0
    %299 = vmatpush1.msra.mxu0 0.0
    %300 = vmatprep.subr.mxu0 0.0
    %301 = vmatpush1.msra.mxu0 0.0
    %302 = vmatprep.subr.mxu0 0.0
    %303 = vmatpush1.msra.mxu0 0.0
    %304 = vmatprep.subr.mxu0 0.0
    %305 = vmatpush1.msra.mxu0 0.0
    %306 = vmatprep.subr.mxu0 0.0
    %307 = vmatpush1.msra.mxu0 0.0
    %308 = vmatprep.subr.mxu0 0.0
    %309 = vmatpush1.msra.mxu0 0.0
    %310 = vmatprep.subr.mxu0 0.0
    %311 = vmatpush1.msra.mxu0 0.0
    %312 = vmatprep.subr.mxu0 0.0
    %313 = vmatpush1.msra.mxu0 0.0
    %314 = vmatprep.subr.mxu0 0.0
    %315 = vmatpush1.msra.mxu0 0.0
    %316 = vmatprep.subr.mxu0 0.0
    %317 = vmatpush1.msra.mxu0 0.0
    %318 = vmatprep.subr.mxu0 0.0
    %319 = vmatpush1.msra.mxu0 0.0
    %320 = vmatprep.subr.mxu0 0.0
    %321 = vmatpush1.msra.mxu0 0.0
    %322 = vmatprep.subr.mxu0 0.0
    %323 = vmatpush1.msra.mxu0 0.0
    %324 = vmatprep.subr.mxu0 0.0
    %325 = vmatpush1.msra.mxu0 0.0
    %326 = vmatprep.subr.mxu0 0.0
    %327 = vmatpush1.msra.mxu0 0.0
    %328 = vmatprep.mubr.f32.mxu0 0.0
    %329 = vmatmul.mubr.f32.gmra.mrb[0].mxu0 %v238
    %v330 = vpop.f32.mrb[0].mxu0
    %v331 = vadd.f32 %v262, %v330
    %v332 = vpop.f32.mrb[0].mxu0
    %333 = vdwg.mxu0
    %v334 = vmax.f32 %v331, 0.0
    %s335 = scalar_lea.vmem [#allocation7], 256
    %v336 = vld [vmem:[%s335] sm:$0xff]
    %v337 = vld [vmem:[%s335 + $0x8] sm:$0xff]
    %v338 = vld [vmem:[%s335 + $0x10] sm:$0xff]
    %v339 = vld [vmem:[%s335 + $0x18] sm:$0xff]
    %v340 = vld [vmem:[%s335 + $0x20] sm:$0xff]
    %v341 = vld [vmem:[%s335 + $0x28] sm:$0xff]
    %v342 = vld [vmem:[%s335 + $0x30] sm:$0xff]
    %v343 = vld [vmem:[%s335 + $0x38] sm:$0xff]
    %v344 = vld [vmem:[%s335 + $0x40] sm:$0xff]
    %v345 = vld [vmem:[%s335 + $0x48] sm:$0xff]
    %v346 = vld [vmem:[%s335 + $0x50] sm:$0xff]
    %v347 = vld [vmem:[%s335 + $0x58] sm:$0xff]
    %v348 = vld [vmem:[%s335 + $0x60] sm:$0xff]
    %v349 = vld [vmem:[%s335 + $0x68] sm:$0xff]
    %v350 = vld [vmem:[%s335 + $0x70] sm:$0xff]
    %v351 = vld [vmem:[%s335 + $0x78] sm:$0xff]
    %s352 = scalar_lea.vmem %s3, 3
    %v353 = vld [vmem:[%s352] sm:$0x1]
    %v355 = vlaneseq
    %v356 = vshrl.u32 %v355, 7
    %v357 = vsub.s32 0, %v356
    %v358 = vrot.slane %v353, %v357
    %360 = vmatprep.subr.mxu0 0.0
    %361 = vmatpush1.msra.mxu0 %v336
    %362 = vmatprep.subr.mxu0 0.0
    %363 = vmatpush1.msra.mxu0 %v337
    %364 = vmatprep.subr.mxu0 0.0
    %365 = vmatpush1.msra.mxu0 %v338
    %366 = vmatprep.subr.mxu0 0.0
    %367 = vmatpush1.msra.mxu0 %v339
    %368 = vmatprep.subr.mxu0 0.0
    %369 = vmatpush1.msra.mxu0 %v340
    %370 = vmatprep.subr.mxu0 0.0
    %371 = vmatpush1.msra.mxu0 %v341
    %372 = vmatprep.subr.mxu0 0.0
    %373 = vmatpush1.msra.mxu0 %v342
    %374 = vmatprep.subr.mxu0 0.0
    %375 = vmatpush1.msra.mxu0 %v343
    %376 = vmatprep.subr.mxu0 0.0
    %377 = vmatpush1.msra.mxu0 %v344
    %378 = vmatprep.subr.mxu0 0.0
    %379 = vmatpush1.msra.mxu0 %v345
    %380 = vmatprep.subr.mxu0 0.0
    %381 = vmatpush1.msra.mxu0 %v346
    %382 = vmatprep.subr.mxu0 0.0
    %383 = vmatpush1.msra.mxu0 %v347
    %384 = vmatprep.subr.mxu0 0.0
    %385 = vmatpush1.msra.mxu0 %v348
    %386 = vmatprep.subr.mxu0 0.0
    %387 = vmatpush1.msra.mxu0 %v349
    %388 = vmatprep.subr.mxu0 0.0
    %389 = vmatpush1.msra.mxu0 %v350
    %390 = vmatprep.subr.mxu0 0.0
    %391 = vmatpush1.msra.mxu0 %v351
    %392 = vmatprep.subr.mxu0 0.0
    %393 = vmatpush1.msra.mxu0 0.0
    %394 = vmatprep.subr.mxu0 0.0
    %395 = vmatpush1.msra.mxu0 0.0
    %396 = vmatprep.subr.mxu0 0.0
    %397 = vmatpush1.msra.mxu0 0.0
    %398 = vmatprep.subr.mxu0 0.0
    %399 = vmatpush1.msra.mxu0 0.0
    %400 = vmatprep.subr.mxu0 0.0
    %401 = vmatpush1.msra.mxu0 0.0
    %402 = vmatprep.subr.mxu0 0.0
    %403 = vmatpush1.msra.mxu0 0.0
    %404 = vmatprep.subr.mxu0 0.0
    %405 = vmatpush1.msra.mxu0 0.0
    %406 = vmatprep.subr.mxu0 0.0
    %407 = vmatpush1.msra.mxu0 0.0
    %408 = vmatprep.subr.mxu0 0.0
    %409 = vmatpush1.msra.mxu0 0.0
    %410 = vmatprep.subr.mxu0 0.0
    %411 = vmatpush1.msra.mxu0 0.0
    %412 = vmatprep.subr.mxu0 0.0
    %413 = vmatpush1.msra.mxu0 0.0
    %414 = vmatprep.subr.mxu0 0.0
    %415 = vmatpush1.msra.mxu0 0.0
    %416 = vmatprep.subr.mxu0 0.0
    %417 = vmatpush1.msra.mxu0 0.0
    %418 = vmatprep.subr.mxu0 0.0
    %419 = vmatpush1.msra.mxu0 0.0
    %420 = vmatprep.subr.mxu0 0.0
    %421 = vmatpush1.msra.mxu0 0.0
    %422 = vmatprep.subr.mxu0 0.0
    %423 = vmatpush1.msra.mxu0 0.0
    %424 = vmatprep.mubr.f32.mxu0 0.0
    %425 = vmatmul.mubr.f32.gmra.mrb[0].mxu0 %v334
    %v426 = vpop.f32.mrb[0].mxu0
    %v427 = vadd.f32 %v358, %v426
    %v428 = vpop.f32.mrb[0].mxu0
    %429 = vdwg.mxu0
    %v430 = vmax.f32 %v427, 0.0
    %s431 = scalar_lea.vmem [#allocation7], 384
    %v432 = vld [vmem:[%s431] sm:$0xff]
    %v433 = vld [vmem:[%s431 + $0x8] sm:$0xff]
    %v434 = vld [vmem:[%s431 + $0x10] sm:$0xff]
    %v435 = vld [vmem:[%s431 + $0x18] sm:$0xff]
    %v436 = vld [vmem:[%s431 + $0x20] sm:$0xff]
    %v437 = vld [vmem:[%s431 + $0x28] sm:$0xff]
    %v438 = vld [vmem:[%s431 + $0x30] sm:$0xff]
    %v439 = vld [vmem:[%s431 + $0x38] sm:$0xff]
    %v440 = vld [vmem:[%s431 + $0x40] sm:$0xff]
    %v441 = vld [vmem:[%s431 + $0x48] sm:$0xff]
    %v442 = vld [vmem:[%s431 + $0x50] sm:$0xff]
    %v443 = vld [vmem:[%s431 + $0x58] sm:$0xff]
    %v444 = vld [vmem:[%s431 + $0x60] sm:$0xff]
    %v445 = vld [vmem:[%s431 + $0x68] sm:$0xff]
    %v446 = vld [vmem:[%s431 + $0x70] sm:$0xff]
    %v447 = vld [vmem:[%s431 + $0x78] sm:$0xff]
    %s448 = scalar_lea.vmem %s3, 4
    %v449 = vld [vmem:[%s448] sm:$0x1]
    %v451 = vlaneseq
    %v452 = vshrl.u32 %v451, 7
    %v453 = vsub.s32 0, %v452
    %v454 = vrot.slane %v449, %v453
    %456 = vmatprep.subr.mxu0 0.0
    %457 = vmatpush1.msra.mxu0 %v432
    %458 = vmatprep.subr.mxu0 0.0
    %459 = vmatpush1.msra.mxu0 %v433
    %460 = vmatprep.subr.mxu0 0.0
    %461 = vmatpush1.msra.mxu0 %v434
    %462 = vmatprep.subr.mxu0 0.0
    %463 = vmatpush1.msra.mxu0 %v435
    %464 = vmatprep.subr.mxu0 0.0
    %465 = vmatpush1.msra.mxu0 %v436
    %466 = vmatprep.subr.mxu0 0.0
    %467 = vmatpush1.msra.mxu0 %v437
    %468 = vmatprep.subr.mxu0 0.0
    %469 = vmatpush1.msra.mxu0 %v438
    %470 = vmatprep.subr.mxu0 0.0
    %471 = vmatpush1.msra.mxu0 %v439
    %472 = vmatprep.subr.mxu0 0.0
    %473 = vmatpush1.msra.mxu0 %v440
    %474 = vmatprep.subr.mxu0 0.0
    %475 = vmatpush1.msra.mxu0 %v441
    %476 = vmatprep.subr.mxu0 0.0
    %477 = vmatpush1.msra.mxu0 %v442
    %478 = vmatprep.subr.mxu0 0.0
    %479 = vmatpush1.msra.mxu0 %v443
    %480 = vmatprep.subr.mxu0 0.0
    %481 = vmatpush1.msra.mxu0 %v444
    %482 = vmatprep.subr.mxu0 0.0
    %483 = vmatpush1.msra.mxu0 %v445
    %484 = vmatprep.subr.mxu0 0.0
    %485 = vmatpush1.msra.mxu0 %v446
    %486 = vmatprep.subr.mxu0 0.0
    %487 = vmatpush1.msra.mxu0 %v447
    %488 = vmatprep.subr.mxu0 0.0
    %489 = vmatpush1.msra.mxu0 0.0
    %490 = vmatprep.subr.mxu0 0.0
    %491 = vmatpush1.msra.mxu0 0.0
    %492 = vmatprep.subr.mxu0 0.0
    %493 = vmatpush1.msra.mxu0 0.0
    %494 = vmatprep.subr.mxu0 0.0
    %495 = vmatpush1.msra.mxu0 0.0
    %496 = vmatprep.subr.mxu0 0.0
    %497 = vmatpush1.msra.mxu0 0.0
    %498 = vmatprep.subr.mxu0 0.0
    %499 = vmatpush1.msra.mxu0 0.0
    %500 = vmatprep.subr.mxu0 0.0
    %501 = vmatpush1.msra.mxu0 0.0
    %502 = vmatprep.subr.mxu0 0.0
    %503 = vmatpush1.msra.mxu0 0.0
    %504 = vmatprep.subr.mxu0 0.0
    %505 = vmatpush1.msra.mxu0 0.0
    %506 = vmatprep.subr.mxu0 0.0
    %507 = vmatpush1.msra.mxu0 0.0
    %508 = vmatprep.subr.mxu0 0.0
    %509 = vmatpush1.msra.mxu0 0.0
    %510 = vmatprep.subr.mxu0 0.0
    %511 = vmatpush1.msra.mxu0 0.0
    %512 = vmatprep.subr.mxu0 0.0
    %513 = vmatpush1.msra.mxu0 0.0
    %514 = vmatprep.subr.mxu0 0.0
    %515 = vmatpush1.msra.mxu0 0.0
    %516 = vmatprep.subr.mxu0 0.0
    %517 = vmatpush1.msra.mxu0 0.0
    %518 = vmatprep.subr.mxu0 0.0
    %519 = vmatpush1.msra.mxu0 0.0
    %520 = vmatprep.mubr.f32.mxu0 0.0
    %521 = vmatmul.mubr.f32.gmra.mrb[0].mxu0 %v430
    %v522 = vpop.f32.mrb[0].mxu0
    %v523 = vadd.f32 %v454, %v522
    %v524 = vpop.f32.mrb[0].mxu0
    %525 = vdwg.mxu0
    %526 = vst [vmem:[#allocation8] sm:$0xff] %v523
    // Predicated region
    $region30: #{tpu_custom_call.1} parent=1 // pred_check
      _
    $region31: #{tpu_custom_call.1} parent=1 // pred_check_branch
      %528 = sbr.rel (0) target = $region33
    $region32: #{tpu_custom_call.1} parent=1 // pred_region
      %s530 = ssub.s32 128, 128
      %531 = vsyncadd [#allocation4], %s530
      %s533 = sshll.u32 [#allocation8], 4
      %s534 = int_to_ptr.vmem [resolvable:$true] %s533
      %536 = dma.vmem_to_hbm [thread:$0]  %s534, 128, %s4, [#allocation4]
    $region33: #{tpu_custom_call.1} parent=1 // pred_fallthru
      _
    // Predicated region
    $region34: #{tpu_custom_call.1} parent=1 // pred_check
      _
    $region35: #{tpu_custom_call.1} parent=1 // pred_check_branch
      %538 = sbr.rel (0) target = $region37
    $region36: #{tpu_custom_call.1} parent=1 // pred_region
      %539 = dma.done [#allocation4], 128
    $region37: #{tpu_custom_call.1} parent=1 // pred_fallthru
      _
    %540 = vsyncpa [#allocation3], 1
    %541 = vsyncpa [#allocation6], 1
    %542 = vsyncpa [#allocation4], 1

</llo_original>
